<compile_context>
chip_gen: v7x
topology: tpu7x:2x2x1
jax: 0.10.0
libtpu: 0.0.40
codegen_flags: <defaults>
</compile_context>

<pallas_src>
import math
from functools import partial

import jax
import jax.numpy as jnp
from jax.experimental import pallas as pl
from jax.experimental.pallas import tpu as pltpu


# ----------------------------- small helpers -----------------------------

def _erf(x):
    # Abramowitz & Stegun 7.1.26 (|err| <= 1.5e-7): VPU ops + EUP exp only,
    # matches exact-erf nn.GELU() to f32 noise and lowers on all TPU gens.
    a1, a2, a3, a4, a5 = 0.254829592, -0.284496736, 1.421413741, -1.453152027, 1.061405429
    p = 0.3275911
    z = jnp.abs(x)
    t = 1.0 / (1.0 + p * z)
    poly = ((((a5 * t + a4) * t + a3) * t + a2) * t + a1) * t
    y = 1.0 - poly * jnp.exp(-z * z)
    return jnp.where(x >= 0, y, -y)


def _gelu(x):
    # exact-erf GELU (nn.GELU() default)
    return 0.5 * x * (1.0 + _erf(x * 0.7071067811865476))


def bn_affine(bn, eps=1e-5):
    """Eval-mode BatchNorm2d -> per-channel (scale, shift)."""
    s = bn['gamma'] * jax.lax.rsqrt(bn['var'] + eps)
    t = bn['beta'] - bn['mean'] * s
    return s, t


def _prune_taps(k, dil, pad, H, W):
    """Keep only taps whose dilated offset can overlap the unpadded HxW map
    (pruned taps only ever read zero padding)."""
    taps, idx = [], []
    for kh in range(k):
        for kw in range(k):
            oh, ow = kh * dil - pad, kw * dil - pad
            if abs(oh) <= H - 1 and abs(ow) <= W - 1:
                taps.append((oh, ow))
                idx.append(kh * k + kw)
    ph = max(abs(oh) for oh, _ in taps)
    pw = max(abs(ow) for _, ow in taps)
    return taps, idx, ph, pw


def _full_spec(shape):
    zeros = (0,) * len(shape)
    return pl.BlockSpec(shape, lambda i, z=zeros: z)


# single-step kernels (no row split); scoped-VMEM limit is safe on v5e/v6e/v7x
_SINGLE_STEP = pltpu.CompilerParams(dimension_semantics=("arbitrary",),
                                    vmem_limit_bytes=32 * 1024 * 1024)


# ----------------------------- Pallas kernels -----------------------------

def _block_kernel(x_ref, w1_ref, b1_ref, dw7w_ref, dw7b_ref, dw11w_ref, dw11b_ref,
                  wl_ref, bl_ref, w2_ref, b2_ref, rs1_ref,
                  wf1_ref, bf1_ref, dw3w_ref, dw3b_ref, wf2_ref, bf2_ref,
                  lng_ref, lnb_ref, o_ref,
                  pad7_ref, pad11_ref, pad3_ref, abuf_ref, hbuf_ref,
                  *, B, H, W, taps7, pads7, taps11, pads11, taps3, pads3,
                  apply_ln, ln_eps):
    """Fused VAN block on a (B*H*W, C) activation (rows row-major over B,H,W)."""
    f32, bf16 = jnp.float32, jnp.bfloat16

    def dwconv(v2, w_ref, b_ref, taps, pads, pad_ref, out_ref):
        # depthwise conv, stride 1, on (B*H*W, Cc) rows; intermediates in VMEM.
        if len(taps) == 1 and taps[0] == (0, 0):
            # degenerate (all off-centre taps pruned): per-channel scale + bias
            return v2 * w_ref[0:1, :] + b_ref[...]
        ph, pw = pads
        pad_ref[...] = jnp.zeros(pad_ref.shape, pad_ref.dtype)
        for b in range(B):
            for h in range(H):
                r = (b * H + h) * W
                pad_ref[b, ph + h, pw:pw + W, :] = v2[r:r + W, :]
        w = w_ref[...]                                     # (T, Cc): hoisted single load
        acc = None
        for ti, (oh, ow) in enumerate(taps):
            patch = pad_ref[:, ph + oh:ph + oh + H, pw + ow:pw + ow + W, :]
            term = patch * w[ti].reshape(1, 1, 1, -1)
            acc = term if acc is None else acc + term
        acc = acc + b_ref[...].reshape(1, 1, 1, -1)
        for b in range(B):
            for h in range(H):
                r = (b * H + h) * W
                out_ref[r:r + W, :] = acc[b, h]
        return out_ref[...]

    x2 = x_ref[...]                                        # (M, C) f32

    # ---- Attention branch (norm1, layer_scale_1 and BN shortcut folded):
    #   x <- x*(1+ls1*s1) + [z*(dw11(dw7(z)) @ Wl + bl)] @ (ls1*Wp2) + ls1*(bp2+t1)
    #   with z = gelu(x @ (s1*Wp1) + (t1@Wp1 + bp1))
    z2 = _gelu(jnp.dot(x2.astype(bf16), w1_ref[...], preferred_element_type=f32)
               + b1_ref[...])
    a2 = dwconv(z2, dw7w_ref, dw7b_ref, taps7, pads7, pad7_ref, abuf_ref)
    a2 = dwconv(a2, dw11w_ref, dw11b_ref, taps11, pads11, pad11_ref, abuf_ref)
    g2 = z2 * (jnp.dot(a2.astype(bf16), wl_ref[...], preferred_element_type=f32)
               + bl_ref[...])
    x2 = (x2 * rs1_ref[...]
          + jnp.dot(g2.astype(bf16), w2_ref[...], preferred_element_type=f32)
          + b2_ref[...])

    # ---- MLP branch (norm2 and layer_scale_2 folded):
    #   x <- x + gelu(dw3(x @ (s2*Wf1) + b') + b_dw) @ (ls2*Wf2) + ls2*bf2
    h2 = (jnp.dot(x2.astype(bf16), wf1_ref[...], preferred_element_type=f32)
          + bf1_ref[...])
    h2 = _gelu(dwconv(h2, dw3w_ref, dw3b_ref, taps3, pads3, pad3_ref, hbuf_ref))
    x2 = (x2
          + jnp.dot(h2.astype(bf16), wf2_ref[...], preferred_element_type=f32)
          + bf2_ref[...])

    # ---- stage-final LayerNorm fused as epilogue of the stage's last block
    if apply_ln:
        mu = jnp.mean(x2, axis=-1, keepdims=True)
        var = jnp.mean(jnp.square(x2 - mu), axis=-1, keepdims=True)
        x2 = (x2 - mu) * jax.lax.rsqrt(var + ln_eps) * lng_ref[...] + lnb_ref[...]

    o_ref[...] = x2.astype(o_ref.dtype)


def _embed_kernel(x_ref, w_ref, b_ref, o_ref):
    o_ref[...] = (jnp.dot(x_ref[...], w_ref[...], preferred_element_type=jnp.float32)
                  + b_ref[...]).astype(o_ref.dtype)


def _pool_head_kernel(tok_ref, w_ref, b_ref, o_ref):
    feat = jnp.mean(tok_ref[...].astype(jnp.float32), axis=1)          # (B, C)
    o_ref[...] = (jnp.dot(feat.astype(jnp.bfloat16), w_ref[...],
                          preferred_element_type=jnp.float32)
                  + b_ref[...]).astype(o_ref.dtype)


# ----------------------------- Pallas wrappers -----------------------------

def block_forward(x2d, B, H, W, d, ln_g, ln_b, apply_ln):
    """One fused VAN block (Attention + Mlp branches, optional stage LayerNorm)."""
    M, C = x2d.shape
    Hd = d['wf1'].shape[1]

    taps7, idx7, ph7, pw7 = _prune_taps(7, 1, 3, H, W)
    taps11, idx11, ph11, pw11 = _prune_taps(11, 5, 25, H, W)
    taps3, idx3, ph3, pw3 = _prune_taps(3, 1, 1, H, W)
    dw7_w = d['dw7_w'][jnp.asarray(idx7, jnp.int32)]
    dw11_w = d['dw11_w'][jnp.asarray(idx11, jnp.int32)]
    dw3_w = d['dw3_w'][jnp.asarray(idx3, jnp.int32)]

    kernel = partial(_block_kernel, B=B, H=H, W=W,
                     taps7=tuple(taps7), pads7=(ph7, pw7),
                     taps11=tuple(taps11), pads11=(ph11, pw11),
                     taps3=tuple(taps3), pads3=(ph3, pw3),
                     apply_ln=apply_ln, ln_eps=1e-5)

    return pl.pallas_call(
        kernel,
        out_shape=jax.ShapeDtypeStruct((M, C), jnp.float32),
        grid=(1,),
        in_specs=[_full_spec((M, C)),
                  _full_spec((C, C)), _full_spec((1, C)),
                  _full_spec((len(taps7), C)), _full_spec((1, C)),
                  _full_spec((len(taps11), C)), _full_spec((1, C)),
                  _full_spec((C, C)), _full_spec((1, C)),
                  _full_spec((C, C)), _full_spec((1, C)), _full_spec((1, C)),
                  _full_spec((C, Hd)), _full_spec((1, Hd)),
                  _full_spec((len(taps3), Hd)), _full_spec((1, Hd)),
                  _full_spec((Hd, C)), _full_spec((1, C)),
                  _full_spec((1, C)), _full_spec((1, C))],
        out_specs=_full_spec((M, C)),
        scratch_shapes=[
            pltpu.VMEM((B, H + 2 * ph7, W + 2 * pw7, C), jnp.float32),    # dw7 halo buf
            pltpu.VMEM((B, H + 2 * ph11, W + 2 * pw11, C), jnp.float32),  # dw11 halo buf
            pltpu.VMEM((B, H + 2 * ph3, W + 2 * pw3, Hd), jnp.float32),   # dw3 halo buf
            pltpu.VMEM((M, C), jnp.float32),                              # attn dwconv out
            pltpu.VMEM((M, Hd), jnp.float32),                             # mlp dwconv out
        ],
        compiler_params=_SINGLE_STEP,
    )(x2d, d['w1'], d['b1'], dw7_w, d['dw7_b'], dw11_w, d['dw11_b'],
      d['wl'], d['bl'], d['w2'], d['b2'], d['rs1'],
      d['wf1'], d['bf1'], dw3_w, d['dw3_b'], d['wf2'], d['bf2'],
      ln_g, ln_b)


def overlap_patch_embed(x_nhwc, pe):
    """Conv(k, stride s, pad k//2) + eval-mode BN (folded) as an im2col matmul."""
    N, H, W, Cin = x_nhwc.shape
    k, s, pad = pe['k'], pe['s'], pe['pad']
    w, b = pe['w'], pe['b']                                   # (k*k*Cin, Cout) bf16, (1, Cout) f32
    Cout = w.shape[1]
    xp = jnp.pad(x_nhwc, ((0, 0), (pad, pad), (pad, pad), (0, 0)))
    Hout = (H + 2 * pad - k) // s + 1
    Wout = (W + 2 * pad - k) // s + 1
    cols = [xp[:, kh::s, kw::s, :][:, :Hout, :Wout, :] for kh in range(k) for kw in range(k)]
    patches = jnp.concatenate(cols, axis=-1).reshape(N * Hout * Wout, k * k * Cin)
    patches = patches.astype(jnp.bfloat16)                    # halve DMA bytes into the kernel
    M, K = patches.shape
    y = pl.pallas_call(
        _embed_kernel,
        out_shape=jax.ShapeDtypeStruct((M, Cout), jnp.float32),
        grid=(1,),
        in_specs=[_full_spec((M, K)), _full_spec((K, Cout)), _full_spec((1, Cout))],
        out_specs=_full_spec((M, Cout)),
        compiler_params=_SINGLE_STEP,
    )(patches, w, b)
    return y, Hout, Wout


def pool_head(tokens, w, b):
    """Fused mean-over-tokens + classifier head.  tokens: (B, L, C), w: (C, ncls) bf16."""
    B, L, C = tokens.shape
    ncls = w.shape[1]
    return pl.pallas_call(
        _pool_head_kernel,
        out_shape=jax.ShapeDtypeStruct((B, ncls), jnp.float32),
        grid=(1,),
        in_specs=[_full_spec((B, L, C)), _full_spec((C, ncls)), _full_spec((1, ncls))],
        out_specs=_full_spec((B, ncls)),
        compiler_params=_SINGLE_STEP,
    )(tokens, w, b)


# ------------------- one-time parameter folding / bf16 prep -------------------

def _fold_block(p):
    s1, t1 = bn_affine(p['norm1'])
    s2, t2 = bn_affine(p['norm2'])
    Wp1 = p['proj1_w'][:, :, 0, 0].T                           # (Cin, Cout)
    Wl = p['lka1_w'][:, :, 0, 0].T
    Wp2 = p['proj2_w'][:, :, 0, 0].T
    Wf1 = p['fc1_w'][:, :, 0, 0].T
    Wf2 = p['fc2_w'][:, :, 0, 0].T
    C = Wp1.shape[0]
    Hd = Wf1.shape[1]
    r2 = lambda v: v.reshape(1, -1).astype(jnp.float32)
    d = {}
    d['w1'] = (s1[:, None] * Wp1).astype(jnp.bfloat16)                     # norm1 folded
    d['b1'] = r2(t1 @ Wp1 + p['proj1_b'])
    d['dw7_w'] = jnp.transpose(p['lka0_w'][:, 0], (1, 2, 0)).reshape(49, C)
    d['dw7_b'] = r2(p['lka0_b'])
    d['dw11_w'] = jnp.transpose(p['lkas_w'][:, 0], (1, 2, 0)).reshape(121, C)
    d['dw11_b'] = r2(p['lkas_b'])
    d['wl'] = Wl.astype(jnp.bfloat16)
    d['bl'] = r2(p['lka1_b'])
    d['w2'] = (Wp2 * p['ls1'][None, :]).astype(jnp.bfloat16)               # layer_scale_1 folded
    d['b2'] = r2(p['ls1'] * (p['proj2_b'] + t1))                           # + BN shortcut
    d['rs1'] = r2(1.0 + p['ls1'] * s1)
    d['wf1'] = (s2[:, None] * Wf1).astype(jnp.bfloat16)                    # norm2 folded
    d['bf1'] = r2(t2 @ Wf1 + p['fc1_b'])
    d['dw3_w'] = jnp.transpose(p['dw_w'][:, 0], (1, 2, 0)).reshape(9, Hd)
    d['dw3_b'] = r2(p['dw_b'])
    d['wf2'] = (Wf2 * p['ls2'][None, :]).astype(jnp.bfloat16)              # layer_scale_2 folded
    d['bf2'] = r2(p['ls2'] * p['fc2_b'])
    return d


def prepare_van_params(params, num_stages):
    prep = {}
    for i in range(num_stages):
        pe = params[f'pe{i}']
        k = pe['k']
        cout, cin = pe['w'].shape[0], pe['w'].shape[1]
        s, t = bn_affine(pe['bn'])
        w2 = jnp.transpose(pe['w'], (2, 3, 1, 0)).reshape(k * k * cin, cout)
        prep[f'pe{i}'] = dict(w=(w2 * s[None, :]).astype(jnp.bfloat16),
                              b=(pe['b'] * s + t).reshape(1, cout).astype(jnp.float32),
                              k=k, s=pe['s'], pad=pe['pad'])
        prep[f'blocks{i}'] = [_fold_block(p) for p in params[f'blocks{i}']]
        ln = params[f'ln{i}']
        prep[f'ln{i}'] = dict(g=ln['g'].reshape(1, -1).astype(jnp.float32),
                              b=ln['b'].reshape(1, -1).astype(jnp.float32))
    prep['head_w'] = params['head_w'].T.astype(jnp.bfloat16)
    prep['head_b'] = params['head_b'].reshape(1, -1).astype(jnp.float32)
    return prep


# ------------------------------- forward pass -------------------------------

def van_forward(prep, x_nchw, num_stages):
    x = jnp.transpose(x_nchw, (0, 2, 3, 1)).astype(jnp.float32)       # NCHW -> NHWC
    B = x.shape[0]
    tokens = None
    for i in range(num_stages):
        x2d, H, W = overlap_patch_embed(x, prep[f'pe{i}'])
        C = x2d.shape[-1]
        blocks = prep[f'blocks{i}']
        ln = prep[f'ln{i}']
        for j, d in enumerate(blocks):
            x2d = block_forward(x2d, B, H, W, d, ln['g'], ln['b'],
                                apply_ln=(j == len(blocks) - 1))
        if i != num_stages - 1:
            x = x2d.reshape(B, H, W, C)                               # spatial NHWC for next stage
        else:
            tokens = x2d.reshape(B, H * W, C)                         # == flatten(2).transpose(1,2)
    return pool_head(tokens, prep['head_w'], prep['head_b'])


# ------------------------- deterministic parameter init -------------------------

class KeyGen:
    def __init__(self, seed):
        self._key = jax.random.PRNGKey(seed)

    def __call__(self):
        self._key, sub = jax.random.split(self._key)
        return sub


def init_conv(kg, cout, cin, kh, kw, groups=1):
    # matches _init_weights: normal(0, sqrt(2/fan_out)), fan_out = kh*kw*cout/groups
    fan_out = kh * kw * cout // groups
    std = math.sqrt(2.0 / fan_out)
    w = (std * jax.random.normal(kg(), (cout, cin // groups, kh, kw))).astype(jnp.float32)
    b = jnp.zeros((cout,), jnp.float32)
    return w, b


def init_bn(C):
    return dict(gamma=jnp.ones((C,), jnp.float32), beta=jnp.zeros((C,), jnp.float32),
                mean=jnp.zeros((C,), jnp.float32), var=jnp.ones((C,), jnp.float32))


def init_block(kg, C, mlp_ratio):
    Hd = int(C * mlp_ratio)
    p = {}
    p['norm1'] = init_bn(C)
    p['proj1_w'], p['proj1_b'] = init_conv(kg, C, C, 1, 1)
    p['lka0_w'], p['lka0_b'] = init_conv(kg, C, C, 7, 7, groups=C)
    p['lkas_w'], p['lkas_b'] = init_conv(kg, C, C, 11, 11, groups=C)
    p['lka1_w'], p['lka1_b'] = init_conv(kg, C, C, 1, 1)
    p['proj2_w'], p['proj2_b'] = init_conv(kg, C, C, 1, 1)
    p['norm2'] = init_bn(C)
    p['fc1_w'], p['fc1_b'] = init_conv(kg, Hd, C, 1, 1)
    p['dw_w'], p['dw_b'] = init_conv(kg, Hd, Hd, 3, 3, groups=Hd)
    p['fc2_w'], p['fc2_b'] = init_conv(kg, C, Hd, 1, 1)
    p['ls1'] = 0.01 * jnp.ones((C,), jnp.float32)
    p['ls2'] = 0.01 * jnp.ones((C,), jnp.float32)
    return p


def init_params(seed, in_chans, embed_dims, mlp_ratios, depths, num_stages, num_classes):
    kg = KeyGen(seed)
    params = {}
    for i in range(num_stages):
        cin = in_chans if i == 0 else embed_dims[i - 1]
        cout = embed_dims[i]
        k = 7 if i == 0 else 3
        s = 4 if i == 0 else 2
        w, b = init_conv(kg, cout, cin, k, k)
        params[f'pe{i}'] = dict(w=w, b=b, k=k, s=s, pad=k // 2, bn=init_bn(cout))
        params[f'blocks{i}'] = [init_block(kg, cout, mlp_ratios[i]) for _ in range(depths[i])]
        params[f'ln{i}'] = dict(g=jnp.ones((cout,), jnp.float32), b=jnp.zeros((cout,), jnp.float32))
    Cl = embed_dims[num_stages - 1]
    params['head_w'] = (0.02 * jax.random.truncated_normal(
        kg(), -2.0, 2.0, (num_classes, Cl))).astype(jnp.float32)
    params['head_b'] = jnp.zeros((num_classes,), jnp.float32)
    return params


# ------------------------------------ main ------------------------------------

if __name__ == "__main__":
    B, in_chans, img = 2, 3, 32
    embed_dims = [8, 16, 32, 64]
    mlp_ratios = [2, 2, 2, 2]
    depths = [1, 1, 1, 1]
    num_stages = 4
    num_classes = 10

    params = init_params(0, in_chans, embed_dims, mlp_ratios, depths, num_stages, num_classes)
    prep = prepare_van_params(params, num_stages)
    x = jax.random.normal(jax.random.PRNGKey(0), (B, in_chans, img, img), jnp.float32)

    logits = van_forward(prep, x, num_stages)
    logits = jax.block_until_ready(logits)
    assert logits.shape == (B, num_classes)
    assert bool(jnp.all(jnp.isfinite(logits)))
    print("KERNEL_OK")
</pallas_src>

<mosaic_0001>
module attributes {stable_mosaic.version = 11 : i64} {
  func.func @_embed_kernel(%arg0: i32, %arg1: memref<128x147xbf16, #tpu.memory_space<vmem>>, %arg2: memref<147x8xbf16, #tpu.memory_space<vmem>>, %arg3: memref<1x8xf32, #tpu.memory_space<vmem>>, %arg4: memref<128x8xf32, #tpu.memory_space<vmem>>) attributes {dimension_semantics = [#tpu.dimension_semantics<arbitrary>], iteration_bounds = array<i64: 1>, scalar_prefetch = 0 : i64, scratch_operands = 0 : i64, tpu.core_type = #tpu.core_type<tc>, window_params = [{pipeline_mode = #tpu.pipeline_mode<synchronous>, transform_indices = @transform_0, window_bounds = array<i64: 128, 147>}, {pipeline_mode = #tpu.pipeline_mode<synchronous>, transform_indices = @transform_1, window_bounds = array<i64: 147, 8>}, {pipeline_mode = #tpu.pipeline_mode<synchronous>, transform_indices = @transform_2, window_bounds = array<i64: 1, 8>}, {pipeline_mode = #tpu.pipeline_mode<synchronous>, transform_indices = @transform_3, window_bounds = array<i64: 128, 8>}]} {
    %c0 = arith.constant 0 : index
    %c0_0 = arith.constant 0 : index
    %0 = vector.load %arg1[%c0, %c0_0] : memref<128x147xbf16, #tpu.memory_space<vmem>>, vector<128x147xbf16>
    %c0_1 = arith.constant 0 : index
    %c0_2 = arith.constant 0 : index
    %1 = vector.load %arg2[%c0_1, %c0_2] : memref<147x8xbf16, #tpu.memory_space<vmem>>, vector<147x8xbf16>
    %cst = arith.constant dense<0.000000e+00> : vector<128x8xf32>
    %2 = tpu.matmul %0, %1, %cst {dimension_numbers = #tpu.dot_dimension_numbers<[1], [0], [0], [1], [0, 0, 1, 1], [], []>} : vector<128x147xbf16>, vector<147x8xbf16>, vector<128x8xf32> -> vector<128x8xf32>
    %c0_3 = arith.constant 0 : index
    %c0_4 = arith.constant 0 : index
    %3 = vector.load %arg3[%c0_3, %c0_4] : memref<1x8xf32, #tpu.memory_space<vmem>>, vector<1x8xf32>
    %4 = vector.broadcast %3 : vector<1x8xf32> to vector<128x8xf32>
    %5 = arith.addf %2, %4 : vector<128x8xf32>
    %c0_5 = arith.constant 0 : index
    %c0_6 = arith.constant 0 : index
    %6 = vector.load %arg4[%c0_5, %c0_6] : memref<128x8xf32, #tpu.memory_space<vmem>>, vector<128x8xf32>
    tpu.vector_store %arg4[%c0_5, %c0_6], %5 {strides = array<i32>} : memref<128x8xf32, #tpu.memory_space<vmem>>, vector<128x8xf32>,
    return
  }
  func.func @transform_0(%arg0: i32) -> (i32, i32) {
    %c0_i32 = arith.constant 0 : i32
    %c0_i32_0 = arith.constant 0 : i32
    %c0_i32_1 = arith.constant 0 : i32
    return %c0_i32, %c0_i32_0 : i32, i32
  }
  func.func @transform_1(%arg0: i32) -> (i32, i32) {
    %c0_i32 = arith.constant 0 : i32
    %c0_i32_0 = arith.constant 0 : i32
    %c0_i32_1 = arith.constant 0 : i32
    return %c0_i32, %c0_i32_0 : i32, i32
  }
  func.func @transform_2(%arg0: i32) -> (i32, i32) {
    %c0_i32 = arith.constant 0 : i32
    %c0_i32_0 = arith.constant 0 : i32
    %c0_i32_1 = arith.constant 0 : i32
    return %c0_i32, %c0_i32_0 : i32, i32
  }
  func.func @transform_3(%arg0: i32) -> (i32, i32) {
    %c0_i32 = arith.constant 0 : i32
    %c0_i32_0 = arith.constant 0 : i32
    %c0_i32_1 = arith.constant 0 : i32
    return %c0_i32, %c0_i32_0 : i32, i32
  }
}

</mosaic_0001>

<llo_original>
// kernel: tpu_custom_call.1
$region0: #{tpu_custom_call.1}
  #allocation0 [shape = 'u32[]', space=smem, size = 0x4, offset = 0x4, fixed_abs, tag = 'smem constant byte address 0x4 - core index']
  #allocation1 [shape = 'u32[144,128]{1,0:T(1,128)}', space=vmem, size = 0x12000, scoped, tag = 'internal scratch']
  %s0 = inlined_call_operand.vmem [shape: bf16[128,147], index: 0, kind: input, shape index: {}]
  %s1 = inlined_call_operand.vmem [shape: bf16[147,8], index: 1, kind: input, shape index: {}]
  %s2 = inlined_call_operand.vmem [shape: f32[1,8], index: 2, kind: input, shape index: {}]
  %s3 = inlined_call_operand.vmem [shape: f32[128,8], index: 3, kind: output, shape index: {}]
  %s4 = sld [smem:[#allocation0]]
  $region22: #{tpu_custom_call.1} parent=0
    _
  %s6 = ssub.s32 1, %s4
  %s7 = scalar_select 0, %s6, %s4
  // Predicated region
  $region2: #{tpu_custom_call.1} parent=0 // pred_check
    _
  $region3: #{tpu_custom_call.1} parent=0 // pred_check_branch
    %9 = sbr.rel (0) target = $region5
  $region4: #{tpu_custom_call.1} parent=0 // pred_region
    _
  $region5: #{tpu_custom_call.1} parent=0 // pred_fallthru
    _
  // Predicated region
  $region6: #{tpu_custom_call.1} parent=0 // pred_check
    _
  $region7: #{tpu_custom_call.1} parent=0 // pred_check_branch
    %11 = sbr.rel (0) target = $region9
  $region8: #{tpu_custom_call.1} parent=0 // pred_region
    _
  $region9: #{tpu_custom_call.1} parent=0 // pred_fallthru
    _
  // Predicated region
  $region10: #{tpu_custom_call.1} parent=0 // pred_check
    _
  $region11: #{tpu_custom_call.1} parent=0 // pred_check_branch
    %13 = sbr.rel (0) target = $region13
  $region12: #{tpu_custom_call.1} parent=0 // pred_region
    _
  $region13: #{tpu_custom_call.1} parent=0 // pred_fallthru
    _
  %v15 = vld [vmem:[%s0] sm:$0xff]
  %v16 = vld [vmem:[%s0 + $0x8] sm:$0xff]
  %v17 = vld [vmem:[%s0 + $0x10] sm:$0xff]
  %v18 = vld [vmem:[%s0 + $0x18] sm:$0xff]
  %v19 = vld [vmem:[%s0 + $0x20] sm:$0xff]
  %v20 = vld [vmem:[%s0 + $0x28] sm:$0xff]
  %v21 = vld [vmem:[%s0 + $0x30] sm:$0xff]
  %v22 = vld [vmem:[%s0 + $0x38] sm:$0xff]
  %v23 = vld [vmem:[%s0 + $0x40] sm:$0xff]
  %v24 = vld [vmem:[%s0 + $0x48] sm:$0xff]
  %v25 = vld [vmem:[%s0 + $0x50] sm:$0xff]
  %v26 = vld [vmem:[%s0 + $0x58] sm:$0xff]
  %v27 = vld [vmem:[%s0 + $0x60] sm:$0xff]
  %v28 = vld [vmem:[%s0 + $0x68] sm:$0xff]
  %v29 = vld [vmem:[%s0 + $0x70] sm:$0xff]
  %v30 = vld [vmem:[%s0 + $0x78] sm:$0xff]
  %v31 = vld [vmem:[%s1] sm:$0xf]
  %v32 = vld [vmem:[%s1 + $0x4] sm:$0xf]
  %v33 = vld [vmem:[%s1 + $0x8] sm:$0xf]
  %v34 = vld [vmem:[%s1 + $0xc] sm:$0xf]
  %v35 = vld [vmem:[%s1 + $0x10] sm:$0xf]
  %v36 = vld [vmem:[%s1 + $0x14] sm:$0xf]
  %v37 = vld [vmem:[%s1 + $0x18] sm:$0xf]
  %v38 = vld [vmem:[%s1 + $0x1c] sm:$0xf]
  %v39 = vld [vmem:[%s1 + $0x20] sm:$0xf]
  %v40 = vld [vmem:[%s1 + $0x24] sm:$0xf]
  %v41 = vld [vmem:[%s1 + $0x28] sm:$0xf]
  %v42 = vld [vmem:[%s1 + $0x2c] sm:$0xf]
  %v43 = vld [vmem:[%s1 + $0x30] sm:$0xf]
  %v44 = vld [vmem:[%s1 + $0x34] sm:$0xf]
  %v45 = vld [vmem:[%s1 + $0x38] sm:$0xf]
  %v46 = vld [vmem:[%s1 + $0x3c] sm:$0xf]
  %v47 = vld [vmem:[%s1 + $0x40] sm:$0xf]
  %v48 = vld [vmem:[%s1 + $0x44] sm:$0xf]
  %v49 = vld [vmem:[%s1 + $0x48] sm:$0x3]
  %v50 = vld [vmem:[%s2] sm:$0x1]
  %v52 = vlaneseq
  %v53 = vshrl.u32 %v52, 7
  %v54 = vsub.s32 0, %v53
  %v55 = vrot.slane %v50, %v54
  %v73 = vunpack.c.l.b16 %v15
  %v74 = vunpack.c.h.b16 %v15
  %v75 = vunpack.c.l.b16 %v16
  %v76 = vunpack.c.h.b16 %v16
  %v77 = vunpack.c.l.b16 %v17
  %v78 = vunpack.c.h.b16 %v17
  %v79 = vunpack.c.l.b16 %v18
  %v80 = vunpack.c.h.b16 %v18
  %v81 = vunpack.c.l.b16 %v19
  %v82 = vunpack.c.h.b16 %v19
  %v83 = vunpack.c.l.b16 %v20
  %v84 = vunpack.c.h.b16 %v20
  %v85 = vunpack.c.l.b16 %v21
  %v86 = vunpack.c.h.b16 %v21
  %v87 = vunpack.c.l.b16 %v22
  %v88 = vunpack.c.h.b16 %v22
  %v89 = vunpack.c.l.b16 %v23
  %v90 = vunpack.c.h.b16 %v23
  %v91 = vunpack.c.l.b16 %v24
  %v92 = vunpack.c.h.b16 %v24
  %v93 = vunpack.c.l.b16 %v25
  %v94 = vunpack.c.h.b16 %v25
  %v95 = vunpack.c.l.b16 %v26
  %v96 = vunpack.c.h.b16 %v26
  %v97 = vunpack.c.l.b16 %v27
  %v98 = vunpack.c.h.b16 %v27
  %v99 = vunpack.c.l.b16 %v28
  %v100 = vunpack.c.h.b16 %v28
  %v101 = vunpack.c.l.b16 %v29
  %v102 = vunpack.c.h.b16 %v29
  %v103 = vunpack.c.l.b16 %v30
  %v104 = vunpack.c.h.b16 %v30
  %v105 = vpack.c.b16 %v75, %v73
  %v106 = vpack.c.b16 %v76, %v74
  %v107 = vpack.c.b16 %v79, %v77
  %v108 = vpack.c.b16 %v80, %v78
  %v109 = vpack.c.b16 %v83, %v81
  %v110 = vpack.c.b16 %v84, %v82
  %v111 = vpack.c.b16 %v87, %v85
  %v112 = vpack.c.b16 %v88, %v86
  %v113 = vpack.c.b16 %v91, %v89
  %v114 = vpack.c.b16 %v92, %v90
  %v115 = vpack.c.b16 %v95, %v93
  %v116 = vpack.c.b16 %v96, %v94
  %v117 = vpack.c.b16 %v99, %v97
  %v118 = vpack.c.b16 %v100, %v98
  %v119 = vpack.c.b16 %v103, %v101
  %v120 = vpack.c.b16 %v104, %v102
  %v148 = vunpack.c.l.b16 %v31
  %v149 = vunpack.c.l.b16 %v32
  %v150 = vunpack.c.l.b16 %v33
  %v151 = vunpack.c.l.b16 %v34
  %v152 = vunpack.c.l.b16 %v35
  %v153 = vunpack.c.l.b16 %v36
  %v154 = vunpack.c.l.b16 %v37
  %v155 = vunpack.c.l.b16 %v38
  %v156 = vunpack.c.l.b16 %v39
  %v157 = vunpack.c.l.b16 %v40
  %v158 = vunpack.c.l.b16 %v41
  %v159 = vunpack.c.l.b16 %v42
  %v160 = vunpack.c.l.b16 %v43
  %v161 = vunpack.c.l.b16 %v44
  %v162 = vunpack.c.l.b16 %v45
  %v163 = vunpack.c.l.b16 %v46
  %v164 = vunpack.c.l.b16 %v47
  %v165 = vunpack.c.l.b16 %v48
  %v166 = vunpack.c.l.b16 %v49
  %v167 = vpack.c.b16 %v149, %v148
  %v168 = vpack.c.b16 %v151, %v150
  %v169 = vpack.c.b16 %v153, %v152
  %v170 = vpack.c.b16 %v155, %v154
  %v171 = vpack.c.b16 %v157, %v156
  %v172 = vpack.c.b16 %v159, %v158
  %v173 = vpack.c.b16 %v161, %v160
  %v174 = vpack.c.b16 %v163, %v162
  %v175 = vpack.c.b16 %v165, %v164
  %v176 = vpack.c.b16 %v166, %v166
  %vm186 = vcmask 154624
  %v188 = vsel %vm186, %v106, 0
  %v191 = vsel %vm186, %v108, 0
  %v194 = vsel %vm186, %v110, 0
  %v197 = vsel %vm186, %v112, 0
  %v200 = vsel %vm186, %v114, 0
  %v203 = vsel %vm186, %v116, 0
  %v206 = vsel %vm186, %v118, 0
  %v209 = vsel %vm186, %v120, 0
  %vm211 = vcmask 1040384
  %vm212 = vcmask 1041408
  %v213 = vsel %vm211, 4294967295, 65535
  %v214 = vsel %vm212, %v213, 0
  %v216 = vand.u32 %v176, %v214
  %218 = vmatprep.subr.bf16.mxu0 0
  %219 = vmatpush1.bf16.msra.mxu0 %v167
  %220 = vmatprep.subr.bf16.mxu0 0
  %221 = vmatpush1.bf16.msra.mxu0 %v168
  %222 = vmatprep.subr.bf16.mxu0 0
  %223 = vmatpush1.bf16.msra.mxu0 %v169
  %224 = vmatprep.subr.bf16.mxu0 0
  %225 = vmatpush1.bf16.msra.mxu0 %v170
  %226 = vmatprep.subr.bf16.mxu0 0
  %227 = vmatpush1.bf16.msra.mxu0 %v171
  %228 = vmatprep.subr.bf16.mxu0 0
  %229 = vmatpush1.bf16.msra.mxu0 %v172
  %230 = vmatprep.subr.bf16.mxu0 0
  %231 = vmatpush1.bf16.msra.mxu0 %v173
  %232 = vmatprep.subr.bf16.mxu0 0
  %233 = vmatpush1.bf16.msra.mxu0 %v174
  %234 = vmatprep.subr.bf16.mxu0 0
  %235 = vmatpush1.bf16.msra.mxu0 %v175
  %236 = vmatprep.subr.bf16.mxu0 0
  %237 = vmatpush1.bf16.msra.mxu0 %v216
  %238 = vmatprep.subr.bf16.mxu0 0
  %239 = vmatpush1.bf16.msra.mxu0 0
  %240 = vmatprep.subr.bf16.mxu0 0
  %241 = vmatpush1.bf16.msra.mxu0 0
  %242 = vmatprep.subr.bf16.mxu0 0
  %243 = vmatpush1.bf16.msra.mxu0 0
  %244 = vmatprep.subr.bf16.mxu0 0
  %245 = vmatpush1.bf16.msra.mxu0 0
  %246 = vmatprep.subr.bf16.mxu0 0
  %247 = vmatpush1.bf16.msra.mxu0 0
  %248 = vmatprep.subr.bf16.mxu0 0
  %249 = vmatpush1.bf16.msra.mxu0 0
  %250 = vmatprep.mubr.bf16.mxu0 %v188
  %251 = vmatmul.mubr.bf16.gmra.mrb[0].mxu0 %v105
  %v252 = vpop.f32.mrb[0].mxu0
  %v253 = vadd.f32 %v55, %v252
  %v254 = vpop.f32.mrb[0].mxu0
  %v255 = vpop.f32.mrb[0].mxu0
  %v256 = vadd.f32 %v55, %v255
  %v257 = vpop.f32.mrb[0].mxu0
  %258 = vmatprep.mubr.bf16.mxu0 %v191
  %259 = vmatmul.mubr.bf16.gmra.mrb[0].mxu0 %v107
  %v260 = vpop.f32.mrb[0].mxu0
  %v261 = vadd.f32 %v55, %v260
  %v262 = vpop.f32.mrb[0].mxu0
  %v263 = vpop.f32.mrb[0].mxu0
  %v264 = vadd.f32 %v55, %v263
  %v265 = vpop.f32.mrb[0].mxu0
  %266 = vmatprep.mubr.bf16.mxu0 %v194
  %267 = vmatmul.mubr.bf16.gmra.mrb[0].mxu0 %v109
  %v268 = vpop.f32.mrb[0].mxu0
  %v269 = vadd.f32 %v55, %v268
  %v270 = vpop.f32.mrb[0].mxu0
  %v271 = vpop.f32.mrb[0].mxu0
  %v272 = vadd.f32 %v55, %v271
  %v273 = vpop.f32.mrb[0].mxu0
  %274 = vmatprep.mubr.bf16.mxu0 %v197
  %275 = vmatmul.mubr.bf16.gmra.mrb[0].mxu0 %v111
  %v276 = vpop.f32.mrb[0].mxu0
  %v277 = vadd.f32 %v55, %v276
  %v278 = vpop.f32.mrb[0].mxu0
  %v279 = vpop.f32.mrb[0].mxu0
  %v280 = vadd.f32 %v55, %v279
  %v281 = vpop.f32.mrb[0].mxu0
  %282 = vmatprep.mubr.bf16.mxu0 %v200
  %283 = vmatmul.mubr.bf16.gmra.mrb[0].mxu0 %v113
  %v284 = vpop.f32.mrb[0].mxu0
  %v285 = vadd.f32 %v55, %v284
  %v286 = vpop.f32.mrb[0].mxu0
  %v287 = vpop.f32.mrb[0].mxu0
  %v288 = vadd.f32 %v55, %v287
  %v289 = vpop.f32.mrb[0].mxu0
  %290 = vmatprep.mubr.bf16.mxu0 %v203
  %291 = vmatmul.mubr.bf16.gmra.mrb[0].mxu0 %v115
  %v292 = vpop.f32.mrb[0].mxu0
  %v293 = vadd.f32 %v55, %v292
  %v294 = vpop.f32.mrb[0].mxu0
  %v295 = vpop.f32.mrb[0].mxu0
  %v296 = vadd.f32 %v55, %v295
  %v297 = vpop.f32.mrb[0].mxu0
  %298 = vmatprep.mubr.bf16.mxu0 %v206
  %299 = vmatmul.mubr.bf16.gmra.mrb[0].mxu0 %v117
  %v300 = vpop.f32.mrb[0].mxu0
  %v301 = vadd.f32 %v55, %v300
  %v302 = vpop.f32.mrb[0].mxu0
  %v303 = vpop.f32.mrb[0].mxu0
  %v304 = vadd.f32 %v55, %v303
  %v305 = vpop.f32.mrb[0].mxu0
  %306 = vmatprep.mubr.bf16.mxu0 %v209
  %307 = vmatmul.mubr.bf16.gmra.mrb[0].mxu0 %v119
  %v308 = vpop.f32.mrb[0].mxu0
  %v309 = vadd.f32 %v55, %v308
  %v310 = vpop.f32.mrb[0].mxu0
  %v311 = vpop.f32.mrb[0].mxu0
  %v312 = vadd.f32 %v55, %v311
  %v313 = vpop.f32.mrb[0].mxu0
  %314 = vdwg.mxu0
  %vm315 = vcmask 64512
  %316 = vst.msk [vmem:[%s3] sm:$0xff] %vm315, %v253
  %317 = vst.msk [vmem:[%s3 + $0x8] sm:$0xff] %vm315, %v256
  %318 = vst.msk [vmem:[%s3 + $0x10] sm:$0xff] %vm315, %v261
  %319 = vst.msk [vmem:[%s3 + $0x18] sm:$0xff] %vm315, %v264
  %320 = vst.msk [vmem:[%s3 + $0x20] sm:$0xff] %vm315, %v269
  %321 = vst.msk [vmem:[%s3 + $0x28] sm:$0xff] %vm315, %v272
  %322 = vst.msk [vmem:[%s3 + $0x30] sm:$0xff] %vm315, %v277
  %323 = vst.msk [vmem:[%s3 + $0x38] sm:$0xff] %vm315, %v280
  %324 = vst.msk [vmem:[%s3 + $0x40] sm:$0xff] %vm315, %v285
  %325 = vst.msk [vmem:[%s3 + $0x48] sm:$0xff] %vm315, %v288
  %326 = vst.msk [vmem:[%s3 + $0x50] sm:$0xff] %vm315, %v293
  %327 = vst.msk [vmem:[%s3 + $0x58] sm:$0xff] %vm315, %v296
  %328 = vst.msk [vmem:[%s3 + $0x60] sm:$0xff] %vm315, %v301
  %329 = vst.msk [vmem:[%s3 + $0x68] sm:$0xff] %vm315, %v304
  %330 = vst.msk [vmem:[%s3 + $0x70] sm:$0xff] %vm315, %v309
  %331 = vst.msk [vmem:[%s3 + $0x78] sm:$0xff] %vm315, %v312
  // Predicated region
  $region14: #{tpu_custom_call.1} parent=0 // pred_check
    _
  $region15: #{tpu_custom_call.1} parent=0 // pred_check_branch
    %333 = sbr.rel (0) target = $region17
  $region16: #{tpu_custom_call.1} parent=0 // pred_region
    _
  $region17: #{tpu_custom_call.1} parent=0 // pred_fallthru
    _
  // Predicated region
  $region18: #{tpu_custom_call.1} parent=0 // pred_check
    _
  $region19: #{tpu_custom_call.1} parent=0 // pred_check_branch
    %335 = sbr.rel (0) target = $region21
  $region20: #{tpu_custom_call.1} parent=0 // pred_region
    _
  $region21: #{tpu_custom_call.1} parent=0 // pred_fallthru
    _

</llo_original>
